<compile_context>
chip_gen: v7x
topology: tpu7x:2x2x1
jax: 0.10.0
libtpu: 0.0.40
codegen_flags: <defaults>
</compile_context>

<pallas_src>
import jax
import jax.numpy as jnp
from jax.experimental import pallas as pl
from jax.experimental.pallas import tpu as pltpu


def _chunk_sizes(leading: int, total_bytes: int, *, max_chunks: int = 4,
                 min_chunk_bytes: int = 4 << 20):
    """Static chunk sizes along the leading axis (always >= 1 chunk)."""
    if leading <= 1 or total_bytes < 2 * min_chunk_bytes:
        return [leading]
    n = min(max_chunks, leading, max(1, total_bytes // min_chunk_bytes))
    base, rem = divmod(leading, n)
    return [base + (1 if i < rem else 0) for i in range(n)]


def _make_dma_identity_kernel(chunks):
    """Kernel: start one HBM->HBM DMA per (static) chunk, then wait on all."""
    starts = []
    s = 0
    for c in chunks:
        starts.append(s)
        s += c
    single = len(chunks) == 1

    def kernel(x_ref, o_ref, sems):
        copies = []
        if single:
            copies.append(pltpu.make_async_copy(x_ref, o_ref, sems.at[0]))
        else:
            for i, (st, sz) in enumerate(zip(starts, chunks)):
                copies.append(
                    pltpu.make_async_copy(
                        x_ref.at[pl.ds(st, sz)],
                        o_ref.at[pl.ds(st, sz)],
                        sems.at[i],
                    )
                )
        for cp in copies:   # issue all DMAs so several are in flight ...
            cp.start()
        for cp in copies:   # ... then wait for completion.
            cp.wait()

    return kernel


def _dma_identity(x: jax.Array) -> jax.Array:
    chunks = _chunk_sizes(x.shape[0], x.size * x.dtype.itemsize)
    n = len(chunks)
    return pl.pallas_call(
        _make_dma_identity_kernel(chunks),
        out_shape=jax.ShapeDtypeStruct(x.shape, x.dtype),
        in_specs=[pl.BlockSpec(memory_space=pl.ANY)],   # raw HBM ref, no auto-DMA
        out_specs=pl.BlockSpec(memory_space=pl.ANY),    # raw HBM ref
        scratch_shapes=[pltpu.SemaphoreType.DMA((n,))],
    )(x)


def variable_size_inspector(x: jax.Array) -> jax.Array:
    """Identity forward of VariableSizeInspector as an HBM->HBM DMA copy.

    Note: a production no-op identity would simply `return x`; the Pallas DMA
    path is kept so the kernel is actually exercised, at the minimum possible
    cost (exactly one HBM read + one HBM write of the array).
    """
    if x.size == 0:
        return x  # nothing to copy; avoid launching a zero-sized DMA
    orig_shape = x.shape
    xk = x if x.ndim >= 1 else x.reshape(1)  # give rank-0 inputs a leading axis
    out = _dma_identity(xk)
    return out.reshape(orig_shape)


if __name__ == "__main__":
    key = jax.random.PRNGKey(0)

    # Small NCHW input consistent with a conv-style module interface.
    x = jax.random.normal(key, (2, 4, 16, 16), dtype=jnp.float32)
    y = jax.block_until_ready(variable_size_inspector(x))
    assert y.shape == x.shape and y.dtype == x.dtype
    assert bool(jnp.all(y == x))

    # Larger input exercises the multi-chunk (concurrent DMA) path.
    x2 = jax.random.normal(key, (8, 512, 1024), dtype=jnp.float32)  # 16 MiB
    y2 = jax.block_until_ready(variable_size_inspector(x2))
    assert bool(jnp.all(y2 == x2))

    # Odd, non-lane-aligned shape: no padding/slicing needed on the DMA path.
    x3 = jax.random.normal(key, (3, 5, 7), dtype=jnp.float32)
    y3 = jax.block_until_ready(variable_size_inspector(x3))
    assert bool(jnp.all(y3 == x3))

    print("KERNEL_OK")
</pallas_src>

<mosaic_0001>
module attributes {stable_mosaic.version = 11 : i64} {
  func.func @kernel(%arg0: memref<2x4x16x16xf32, #tpu.memory_space<any>>, %arg1: memref<2x4x16x16xf32, #tpu.memory_space<any>>, %arg2: memref<1x!tpu.dma_semaphore, #tpu.memory_space<semaphore_mem>>) attributes {dimension_semantics = [], scalar_prefetch = 0 : i64, scratch_operands = 1 : i64, tpu.core_type = #tpu.core_type<tc>} {
    %c0_i32 = arith.constant 0 : i32
    %0 = tpu.memref_slice %arg2[%c0_i32] : memref<1x!tpu.dma_semaphore, #tpu.memory_space<semaphore_mem>> -> memref<1x!tpu.dma_semaphore, #tpu.memory_space<semaphore_mem>>
    %1 = tpu.memref_squeeze %0 : memref<1x!tpu.dma_semaphore, #tpu.memory_space<semaphore_mem>> -> memref<!tpu.dma_semaphore, #tpu.memory_space<semaphore_mem>>
    tpu.enqueue_dma source(%arg0 : memref<2x4x16x16xf32, #tpu.memory_space<any>>) target(%arg1 : memref<2x4x16x16xf32, #tpu.memory_space<any>>) target_semaphore(%1 : memref<!tpu.dma_semaphore, #tpu.memory_space<semaphore_mem>>)
    %c0_i32_0 = arith.constant 0 : i32
    %2 = tpu.memref_slice %arg2[%c0_i32_0] : memref<1x!tpu.dma_semaphore, #tpu.memory_space<semaphore_mem>> -> memref<1x!tpu.dma_semaphore, #tpu.memory_space<semaphore_mem>>
    %3 = tpu.memref_squeeze %2 : memref<1x!tpu.dma_semaphore, #tpu.memory_space<semaphore_mem>> -> memref<!tpu.dma_semaphore, #tpu.memory_space<semaphore_mem>>
    tpu.wait_dma2 semaphore(%3 : memref<!tpu.dma_semaphore, #tpu.memory_space<semaphore_mem>>) src(%arg0 : memref<2x4x16x16xf32, #tpu.memory_space<any>>) dst(%arg1 : memref<2x4x16x16xf32, #tpu.memory_space<any>>)
    return
  }
}

</mosaic_0001>

<llo_original>
// kernel: tpu_custom_call.1
$region0: #{tpu_custom_call.1}
  #allocation0 [shape = 'u32[]', space=smem, size = 0x4, offset = 0x4, fixed_abs, tag = 'smem constant byte address 0x4 - core index']
  #allocation1 [shape = 'u32[144,128]{1,0:T(1,128)}', space=vmem, size = 0x12000, scoped, tag = 'internal scratch']
  #allocation2 [shape = 's32[1]{0}', space=sflag, size = 0x4, scoped, tag = 'scratch operand']
  #allocation3 [shape = 's32[]', space=sflag, size = 0x4, offset = 0, fixed_abs, tag = 'sflag constant byte address 0x0 - dummy sync flag']
  #allocation4 [shape = 'u32[0]{0}', space=smem, size = 0, offset = 0, fixed_abs, tag = 'smem constant byte address 0x0 - null']
  %s0 = inlined_call_operand.hbm [shape: f32[2,4,16,16], index: 0, kind: input, shape index: {}]
  %s1 = inlined_call_operand.hbm [shape: f32[2,4,16,16], index: 1, kind: output, shape index: {}]
  %s2 = sld [smem:[#allocation0]]
  $region2: #{tpu_custom_call.1} parent=0
    _
  %s4 = ssub.s32 1, %s2
  %s5 = scalar_select 0, %s4, %s2
  %s7 = sshll.u32 1, 14
  %s8 = sxor.u32 4294967295, %s7
  %s11 = sshll.u32 3, 24
  %s12 = sxor.u32 4294967295, %s11
  %s13 = sand.u32 0, %s12
  %s15 = sor.u32 %s13, 0
  %18 = dma.general %s0, 2048, %s1, [#allocation2], [#allocation3], [#allocation4], %s15, 0
  %s19 = smul.u32 2, 4
  %s20 = smul.u32 %s19, 16
  %s21 = smul.u32 %s20, 1
  %s22 = sshll.u32 %s21, 4
  %23 = dma.done [#allocation2], %s22
  %24 = vsyncmov [#allocation2]
  %s25 = vpop.sfrf %24
  %p26 = scmp.eq.s32.totalorder %s25, 0
  %p27 = pneg %p26
  %29 = shalt.err (%p27)

</llo_original>
